<compile_context>
chip_gen: v7x
topology: tpu7x:2x2x1
jax: 0.10.0
libtpu: 0.0.40
codegen_flags: <defaults>
</compile_context>

<pallas_src>
import math
import functools

import jax
import jax.numpy as jnp
from jax.experimental import pallas as pl
from jax.experimental.pallas import tpu as pltpu


def _round_up(x: int, m: int) -> int:
    return ((x + m - 1) // m) * m


def _round_down(x: int, m: int) -> int:
    return (x // m) * m


# ---------------------------------------------------------------------------
# Fast path kernel: W^T and bias are VMEM-resident, grid only over batch rows.
# ---------------------------------------------------------------------------
def _linear_resident_kernel(x_ref, w_ref, b_ref, o_ref):
    # x_ref: (tm, In)   w_ref: (In, Out)   b_ref: (1, Out)   o_ref: (tm, Out)
    o_ref[...] = (
        jnp.dot(x_ref[...], w_ref[...], preferred_element_type=jnp.float32)
        + b_ref[...]
    ).astype(o_ref.dtype)


# ---------------------------------------------------------------------------
# General path kernel: tiled GEMM with f32 accumulator (large In / Out only).
# ---------------------------------------------------------------------------
def _linear_tiled_kernel(x_ref, w_ref, b_ref, o_ref, acc_ref):
    k = pl.program_id(2)

    @pl.when(k == 0)
    def _init():
        acc_ref[...] = jnp.zeros_like(acc_ref)

    acc_ref[...] += jnp.dot(
        x_ref[...], w_ref[...], preferred_element_type=jnp.float32)

    @pl.when(k == pl.num_programs(2) - 1)
    def _finalize():
        o_ref[...] = (acc_ref[...] + b_ref[...]).astype(o_ref.dtype)


def prepare_params(weight, bias, *, resident_budget_bytes=4 << 20,
                   tn_cap=256, tk_cap=512):
    """One-time parameter prep (off the per-call hot path).

    weight: [Out, In] (PyTorch nn.Linear layout), bias: [Out].
    """
    Out, In = weight.shape
    resident = (In * Out + Out) * 4 <= resident_budget_bytes
    if resident:
        # Fast path: transpose once, NO padding at all.
        w_t = weight.T                      # [In, Out]
        b_p = bias.reshape(1, Out)          # [1, Out]
        meta = dict(In=In, Out=Out, resident=True)
        return w_t, b_p, meta

    # General path: lane-dense (128-padded) K/N tiles for the tiled kernel.
    tn = min(tn_cap, _round_up(Out, 128))
    tk = min(tk_cap, _round_up(In, 128))
    Np = _round_up(Out, tn)
    Kp = _round_up(In, tk)
    w_t = jnp.pad(weight.T, ((0, Kp - In), (0, Np - Out)))   # [Kp, Np]
    b_p = jnp.pad(bias, (0, Np - Out)).reshape(1, Np)        # [1,  Np]
    meta = dict(In=In, Out=Out, resident=False, Kp=Kp, Np=Np, tk=tk, tn=tn)
    return w_t, b_p, meta


def linear_forward(x, w_t, b_p, meta, *, tm_cap=512,
                   vmem_tile_budget_bytes=16 << 20):
    """x: [B, In] f32. Params/meta from prepare_params. Returns [B, Out]."""
    B, In = x.shape
    assert In == meta["In"]
    Out = meta["Out"]

    if meta["resident"]:
        # ----------------------- FAST PATH -----------------------
        Mp8 = _round_up(B, 8)
        # Bound tm by a VMEM budget (double-buffered x and out tiles) so the
        # config is safe on v7x's 64 MiB physical VMEM as well as v5e/v6e.
        tm_by_vmem = max(8, _round_down(
            vmem_tile_budget_bytes // (8 * (In + Out)), 8))
        tm = max(8, min(tm_cap, Mp8, tm_by_vmem))
        # Guarantee >= 2 M-steps when possible so the "parallel" axis actually
        # shards across v7x's two TensorCores (no-op cost on v5e/v6e).
        if pl.cdiv(Mp8, tm) < 2 and Mp8 >= 16:
            tm = max(8, _round_down(Mp8 // 2, 8))

        # Hot path: no padding unless B is not a multiple of tm (tail only).
        Mp = _round_up(B, tm)
        xp = x if Mp == B else jnp.pad(x, ((0, Mp - B), (0, 0)))

        out = pl.pallas_call(
            _linear_resident_kernel,
            out_shape=jax.ShapeDtypeStruct((Mp, Out), x.dtype),
            grid=(Mp // tm,),
            in_specs=[
                # x tile streams; K extent equals the full array dim (no pad).
                pl.BlockSpec((tm, In), lambda i: (i, 0)),
                # W^T and bias: full-array blocks, constant index map ->
                # DMA'd once, VMEM-resident across all grid steps.
                pl.BlockSpec((In, Out), lambda i: (0, 0)),
                pl.BlockSpec((1, Out), lambda i: (0, 0)),
            ],
            # Unpadded output block (masked stores beat 8x DMA inflation).
            out_specs=pl.BlockSpec((tm, Out), lambda i: (i, 0)),
            compiler_params=pltpu.CompilerParams(
                dimension_semantics=("parallel",)),
            cost_estimate=pl.CostEstimate(
                flops=2 * Mp * In * Out,
                transcendentals=0,
                bytes_accessed=4 * (Mp * In + In * Out + Out + Mp * Out)),
        )(xp, w_t, b_p)
        return out if Mp == B else out[:B]

    # ----------------------- GENERAL PATH (large In/Out) -----------------------
    Kp, Np, tk, tn = meta["Kp"], meta["Np"], meta["tk"], meta["tn"]
    tm = min(tm_cap, _round_up(B, 8))
    Mp = _round_up(B, tm)
    # Cold path only: padding here is acceptable because W^T is too large to
    # keep resident anyway and the kernel is compute-dominated.
    xp = jnp.pad(x, ((0, Mp - B), (0, Kp - In)))

    grid = (Mp // tm, Np // tn, Kp // tk)
    out_p = pl.pallas_call(
        _linear_tiled_kernel,
        out_shape=jax.ShapeDtypeStruct((Mp, Np), x.dtype),
        grid=grid,
        in_specs=[
            pl.BlockSpec((tm, tk), lambda i, j, k: (i, k)),   # x tile
            pl.BlockSpec((tk, tn), lambda i, j, k: (k, j)),   # W^T tile
            pl.BlockSpec((1, tn), lambda i, j, k: (0, j)),    # bias tile
        ],
        out_specs=pl.BlockSpec((tm, tn), lambda i, j, k: (i, j)),
        scratch_shapes=[pltpu.VMEM((tm, tn), jnp.float32)],
        compiler_params=pltpu.CompilerParams(
            dimension_semantics=("parallel", "parallel", "arbitrary")),
        cost_estimate=pl.CostEstimate(
            flops=2 * Mp * Np * Kp,
            transcendentals=0,
            bytes_accessed=4 * (Mp * Kp + Kp * Np + Np + Mp * Np)),
    )(xp, w_t, b_p)
    return out_p[:B, :Out]


if __name__ == "__main__":
    # Small shapes consistent with LinearRegression(inputSize, outputSize).
    batch, input_size, output_size = 8, 32, 16

    key = jax.random.PRNGKey(0)
    kx, kw, kb = jax.random.split(key, 3)

    # Deterministic parameter init mimicking torch.nn.Linear defaults:
    # U(-1/sqrt(in), 1/sqrt(in)) for both weight and bias.
    bound = 1.0 / math.sqrt(input_size)
    weight = jax.random.uniform(
        kw, (output_size, input_size), jnp.float32, -bound, bound)
    bias = jax.random.uniform(
        kb, (output_size,), jnp.float32, -bound, bound)

    x = jax.random.normal(kx, (batch, input_size), jnp.float32)

    # One-time parameter prep (transpose, no padding) — off the hot path.
    w_t, b_p, meta = prepare_params(weight, bias)
    fwd = jax.jit(functools.partial(linear_forward, meta=meta))
    out = jax.block_until_ready(fwd(x, w_t, b_p))

    ref = x @ weight.T + bias
    assert out.shape == (batch, output_size)
    assert jnp.allclose(out, ref, atol=1e-5, rtol=1e-5)

    # Extra check: batch not divisible by the chosen row tile (tail-pad path,
    # and >=2 M-steps so "parallel" can shard across v7x's two TensorCores).
    x2 = jax.random.normal(jax.random.PRNGKey(1), (200, input_size), jnp.float32)
    out2 = jax.block_until_ready(
        jax.jit(functools.partial(linear_forward, meta=meta))(x2, w_t, b_p))
    assert out2.shape == (200, output_size)
    assert jnp.allclose(out2, x2 @ weight.T + bias, atol=1e-5, rtol=1e-5)

    # Extra check: force the general tiled-GEMM path (used when W^T is too
    # large for VMEM residency) to make sure it also compiles and is correct.
    w_t_g, b_p_g, meta_g = prepare_params(weight, bias, resident_budget_bytes=0)
    out3 = jax.block_until_ready(
        jax.jit(functools.partial(linear_forward, meta=meta_g))(x, w_t_g, b_p_g))
    assert jnp.allclose(out3, ref, atol=1e-5, rtol=1e-5)

    # TODO(synk): CustomMixin.predict's sklearn StandardScaler preprocessing is
    # host-side data prep, not part of forward(); it is intentionally omitted.
    print("KERNEL_OK")
</pallas_src>

<mosaic_0001>
module attributes {stable_mosaic.version = 11 : i64} {
  func.func @_linear_resident_kernel(%arg0: i32, %arg1: memref<8x32xf32, #tpu.memory_space<vmem>>, %arg2: memref<32x16xf32, #tpu.memory_space<vmem>>, %arg3: memref<1x16xf32, #tpu.memory_space<vmem>>, %arg4: memref<8x16xf32, #tpu.memory_space<vmem>>) attributes {dimension_semantics = [#tpu.dimension_semantics<parallel>], iteration_bounds = array<i64: 1>, scalar_prefetch = 0 : i64, scratch_operands = 0 : i64, tpu.core_type = #tpu.core_type<tc>, window_params = [{transform_indices = @transform_0, window_bounds = array<i64: 8, 32>}, {pipeline_mode = #tpu.pipeline_mode<synchronous>, transform_indices = @transform_1, window_bounds = array<i64: 32, 16>}, {pipeline_mode = #tpu.pipeline_mode<synchronous>, transform_indices = @transform_2, window_bounds = array<i64: 1, 16>}, {transform_indices = @transform_3, window_bounds = array<i64: 8, 16>}]} {
    %c0 = arith.constant 0 : index
    %c0_0 = arith.constant 0 : index
    %0 = vector.load %arg1[%c0, %c0_0] : memref<8x32xf32, #tpu.memory_space<vmem>>, vector<8x32xf32>
    %c0_1 = arith.constant 0 : index
    %c0_2 = arith.constant 0 : index
    %1 = vector.load %arg2[%c0_1, %c0_2] : memref<32x16xf32, #tpu.memory_space<vmem>>, vector<32x16xf32>
    %cst = arith.constant dense<0.000000e+00> : vector<8x16xf32>
    %2 = tpu.matmul %0, %1, %cst {dimension_numbers = #tpu.dot_dimension_numbers<[1], [0], [0], [1], [0, 0, 1, 1], [], []>} : vector<8x32xf32>, vector<32x16xf32>, vector<8x16xf32> -> vector<8x16xf32>
    %c0_3 = arith.constant 0 : index
    %c0_4 = arith.constant 0 : index
    %3 = vector.load %arg3[%c0_3, %c0_4] : memref<1x16xf32, #tpu.memory_space<vmem>>, vector<1x16xf32>
    %4 = vector.broadcast %3 : vector<1x16xf32> to vector<8x16xf32>
    %5 = arith.addf %2, %4 : vector<8x16xf32>
    %c0_5 = arith.constant 0 : index
    %c0_6 = arith.constant 0 : index
    %6 = vector.load %arg4[%c0_5, %c0_6] : memref<8x16xf32, #tpu.memory_space<vmem>>, vector<8x16xf32>
    tpu.vector_store %arg4[%c0_5, %c0_6], %5 {strides = array<i32>} : memref<8x16xf32, #tpu.memory_space<vmem>>, vector<8x16xf32>,
    return
  }
  func.func @transform_0(%arg0: i32) -> (i32, i32) {
    %c0_i32 = arith.constant 0 : i32
    %c0_i32_0 = arith.constant 0 : i32
    return %arg0, %c0_i32 : i32, i32
  }
  func.func @transform_1(%arg0: i32) -> (i32, i32) {
    %c0_i32 = arith.constant 0 : i32
    %c0_i32_0 = arith.constant 0 : i32
    %c0_i32_1 = arith.constant 0 : i32
    return %c0_i32, %c0_i32_0 : i32, i32
  }
  func.func @transform_2(%arg0: i32) -> (i32, i32) {
    %c0_i32 = arith.constant 0 : i32
    %c0_i32_0 = arith.constant 0 : i32
    %c0_i32_1 = arith.constant 0 : i32
    return %c0_i32, %c0_i32_0 : i32, i32
  }
  func.func @transform_3(%arg0: i32) -> (i32, i32) {
    %c0_i32 = arith.constant 0 : i32
    %c0_i32_0 = arith.constant 0 : i32
    return %arg0, %c0_i32 : i32, i32
  }
}

</mosaic_0001>

<llo_original>
// kernel: linear_forward.1
$region0: #{linear_forward.1}
  #allocation0 [shape = 'u32[]', space=smem, size = 0x4, offset = 0x4, fixed_abs, tag = 'smem constant byte address 0x4 - core index']
  #allocation1 [shape = 'u32[144,128]{1,0:T(1,128)}', space=vmem, size = 0x12000, scoped, tag = 'internal scratch']
  %s0 = inlined_call_operand.vmem [shape: f32[8,32], index: 0, kind: input, shape index: {}]
  %s1 = inlined_call_operand.vmem [shape: f32[32,16], index: 1, kind: input, shape index: {}]
  %s2 = inlined_call_operand.vmem [shape: f32[1,16], index: 2, kind: input, shape index: {}]
  %s3 = inlined_call_operand.hbm [shape: f32[8,16], index: 3, kind: output, shape index: {}]
  %s4 = sld [smem:[#allocation0]]
  $region22: #{linear_forward.1} parent=0
    _
  %s6 = ssub.s32 1, %s4
  %s7 = scalar_select 0, %s6, %s4
  $region1: #{linear_forward.1} parent=0
    #allocation2 [shape = 'u8[4096]{0}', space=vmem, size = 0x1000, scoped, tag = 'output window, operand 0, single buffered']
    #allocation3 [shape = 's32[1]{0}', space=sflag, size = 0x4, scoped, tag = 'scoped memory for linear_forward.1']
    %8 = vsyncpa [#allocation3], 0
    // Predicated region
    $region2: #{linear_forward.1} parent=1 // pred_check
      _
    $region3: #{linear_forward.1} parent=1 // pred_check_branch
      %10 = sbr.rel (0) target = $region5
    $region4: #{linear_forward.1} parent=1 // pred_region
      _
    $region5: #{linear_forward.1} parent=1 // pred_fallthru
      _
    // Predicated region
    $region6: #{linear_forward.1} parent=1 // pred_check
      _
    $region7: #{linear_forward.1} parent=1 // pred_check_branch
      %12 = sbr.rel (0) target = $region9
    $region8: #{linear_forward.1} parent=1 // pred_region
      _
    $region9: #{linear_forward.1} parent=1 // pred_fallthru
      _
    // Predicated region
    $region10: #{linear_forward.1} parent=1 // pred_check
      _
    $region11: #{linear_forward.1} parent=1 // pred_check_branch
      %14 = sbr.rel (0) target = $region13
    $region12: #{linear_forward.1} parent=1 // pred_region
      _
    $region13: #{linear_forward.1} parent=1 // pred_fallthru
      _
    %v15 = vld [vmem:[%s0] sm:$0xff]
    %v16 = vld [vmem:[%s1] sm:$0xff]
    %v17 = vld [vmem:[%s1 + $0x8] sm:$0xff]
    %v18 = vld [vmem:[%s1 + $0x10] sm:$0xff]
    %v19 = vld [vmem:[%s1 + $0x18] sm:$0xff]
    %v20 = vld [vmem:[%s2] sm:$0x1]
    %v22 = vlaneseq
    %v23 = vshrl.u32 %v22, 7
    %v24 = vsub.s32 0, %v23
    %v25 = vrot.slane %v20, %v24
    %vm27 = vcmask 261120
    %v29 = vsel %vm27, %v15, 0
    %31 = vmatprep.subr.mxu0 0.0
    %32 = vmatpush1.msra.mxu0 %v16
    %33 = vmatprep.subr.mxu0 0.0
    %34 = vmatpush1.msra.mxu0 %v17
    %35 = vmatprep.subr.mxu0 0.0
    %36 = vmatpush1.msra.mxu0 %v18
    %37 = vmatprep.subr.mxu0 0.0
    %38 = vmatpush1.msra.mxu0 %v19
    %39 = vmatprep.subr.mxu0 0.0
    %40 = vmatpush1.msra.mxu0 0.0
    %41 = vmatprep.subr.mxu0 0.0
    %42 = vmatpush1.msra.mxu0 0.0
    %43 = vmatprep.subr.mxu0 0.0
    %44 = vmatpush1.msra.mxu0 0.0
    %45 = vmatprep.subr.mxu0 0.0
    %46 = vmatpush1.msra.mxu0 0.0
    %47 = vmatprep.subr.mxu0 0.0
    %48 = vmatpush1.msra.mxu0 0.0
    %49 = vmatprep.subr.mxu0 0.0
    %50 = vmatpush1.msra.mxu0 0.0
    %51 = vmatprep.subr.mxu0 0.0
    %52 = vmatpush1.msra.mxu0 0.0
    %53 = vmatprep.subr.mxu0 0.0
    %54 = vmatpush1.msra.mxu0 0.0
    %55 = vmatprep.subr.mxu0 0.0
    %56 = vmatpush1.msra.mxu0 0.0
    %57 = vmatprep.subr.mxu0 0.0
    %58 = vmatpush1.msra.mxu0 0.0
    %59 = vmatprep.subr.mxu0 0.0
    %60 = vmatpush1.msra.mxu0 0.0
    %61 = vmatprep.subr.mxu0 0.0
    %62 = vmatpush1.msra.mxu0 0.0
    %63 = vmatprep.subr.mxu0 0.0
    %64 = vmatpush1.msra.mxu0 0.0
    %65 = vmatprep.subr.mxu0 0.0
    %66 = vmatpush1.msra.mxu0 0.0
    %67 = vmatprep.subr.mxu0 0.0
    %68 = vmatpush1.msra.mxu0 0.0
    %69 = vmatprep.subr.mxu0 0.0
    %70 = vmatpush1.msra.mxu0 0.0
    %71 = vmatprep.subr.mxu0 0.0
    %72 = vmatpush1.msra.mxu0 0.0
    %73 = vmatprep.subr.mxu0 0.0
    %74 = vmatpush1.msra.mxu0 0.0
    %75 = vmatprep.subr.mxu0 0.0
    %76 = vmatpush1.msra.mxu0 0.0
    %77 = vmatprep.subr.mxu0 0.0
    %78 = vmatpush1.msra.mxu0 0.0
    %79 = vmatprep.subr.mxu0 0.0
    %80 = vmatpush1.msra.mxu0 0.0
    %81 = vmatprep.subr.mxu0 0.0
    %82 = vmatpush1.msra.mxu0 0.0
    %83 = vmatprep.subr.mxu0 0.0
    %84 = vmatpush1.msra.mxu0 0.0
    %85 = vmatprep.subr.mxu0 0.0
    %86 = vmatpush1.msra.mxu0 0.0
    %87 = vmatprep.subr.mxu0 0.0
    %88 = vmatpush1.msra.mxu0 0.0
    %89 = vmatprep.subr.mxu0 0.0
    %90 = vmatpush1.msra.mxu0 0.0
    %91 = vmatprep.subr.mxu0 0.0
    %92 = vmatpush1.msra.mxu0 0.0
    %93 = vmatprep.subr.mxu0 0.0
    %94 = vmatpush1.msra.mxu0 0.0
    %95 = vmatprep.mubr.f32.mxu0 0.0
    %96 = vmatmul.mubr.f32.gmra.mrb[0].mxu0 %v29
    %v97 = vpop.f32.mrb[0].mxu0
    %v98 = vadd.f32 %v25, %v97
    %v99 = vpop.f32.mrb[0].mxu0
    %100 = vdwg.mxu0
    %vm101 = vcmask 130048
    %102 = vst.msk [vmem:[#allocation2] sm:$0xff] %vm101, %v98
    // Predicated region
    $region14: #{linear_forward.1} parent=1 // pred_check
      _
    $region15: #{linear_forward.1} parent=1 // pred_check_branch
      %104 = sbr.rel (0) target = $region17
    $region16: #{linear_forward.1} parent=1 // pred_region
      %s106 = ssub.s32 128, 128
      %107 = vsyncadd [#allocation3], %s106
      %s109 = sshll.u32 [#allocation2], 4
      %s110 = int_to_ptr.vmem [resolvable:$true] %s109
      %112 = dma.vmem_to_hbm [thread:$0]  %s110, 128, %s3, [#allocation3]
    $region17: #{linear_forward.1} parent=1 // pred_fallthru
      _
    // Predicated region
    $region18: #{linear_forward.1} parent=1 // pred_check
      _
    $region19: #{linear_forward.1} parent=1 // pred_check_branch
      %114 = sbr.rel (0) target = $region21
    $region20: #{linear_forward.1} parent=1 // pred_region
      %115 = dma.done [#allocation3], 128
    $region21: #{linear_forward.1} parent=1 // pred_fallthru
      _
    %116 = vsyncpa [#allocation3], 1

</llo_original>
